<compile_context>
chip_gen: v7x
topology: tpu7x:2x2x1
jax: 0.10.0
libtpu: 0.0.40
codegen_flags: <defaults>
</compile_context>

<pallas_src>
import functools
import math

import jax
import jax.numpy as jnp
from jax.experimental import pallas as pl
from jax.experimental.pallas import tpu as pltpu


_INV_LN2 = 1.0 / math.log(2.0)


def _round_up(x, m):
    return (x + m - 1) // m * m


def _num_tensorcores():
    """2 only on 2-TensorCore-per-device parts (v7x); 1 on v5e/v6e."""
    try:
        kind = jax.devices()[0].device_kind.lower()
    except Exception:
        return 1
    return 2 if "v7" in kind else 1


def _focal_loss_kernel(logits_ref, target_ref, out_ref, acc_ref, *,
                       gamma, n_rows, tm):
    c = pl.program_id(0)          # core split ("parallel")
    i = pl.program_id(1)          # row tile within this core ("arbitrary")
    nt = pl.num_programs(1)

    @pl.when(i == 0)
    def _init():
        acc_ref[...] = jnp.zeros_like(acc_ref)

    x = logits_ref[...].astype(jnp.float32)               # (TM, C) f32 compute
    t = target_ref[...]                                   # (TM, 1) int32

    # log-softmax pieces (numerically stable, no (TM, C) divide)
    m = jnp.max(x, axis=1, keepdims=True)                 # (TM, 1)
    xm = x - m
    denom = jnp.sum(jnp.exp(xm), axis=1, keepdims=True)   # (TM, 1), >= 1

    # gather x[target] - m via select (no int->f32 convert, no (TM,C) multiply)
    col = jax.lax.broadcasted_iota(jnp.int32, (1, x.shape[1]), 1)   # (1, C) lane iota
    xt = jnp.sum(jnp.where(col == t, xm, 0.0), axis=1, keepdims=True)  # (TM, 1)

    log_pt = xt - jnp.log(denom)                          # ln(Pt) <= 0, always finite
    pt = jnp.exp(log_pt)

    one_minus_pt = 1.0 - pt
    if float(gamma) == int(gamma) and 0 <= int(gamma) <= 8:
        w = jnp.ones_like(one_minus_pt)
        for _ in range(int(gamma)):                       # integer gamma: cheap VPU muls
            w = w * one_minus_pt
    else:
        w = jnp.power(one_minus_pt, jnp.float32(gamma))   # float gamma fallback

    # loss = -(1 - Pt)^gamma * log2(Pt)   (module uses log base 2)
    loss = -(w * log_pt) * _INV_LN2                       # (TM, 1)

    # Tail mask: rows past the real N (partial last tile / clamped OOB tiles)
    # may contain garbage (possibly NaN/Inf) -> MUST be a select, not a multiply.
    row = jax.lax.broadcasted_iota(jnp.int32, loss.shape, 0)
    global_row = (c * nt + i) * tm + row
    loss = jnp.where(global_row < n_rows, loss, 0.0)

    acc_ref[...] += loss                                  # running per-row sum

    @pl.when(i == nt - 1)
    def _finalize():
        partial = jnp.sum(acc_ref[...])
        out_ref[...] = jnp.full(out_ref.shape, partial, dtype=out_ref.dtype)


def focal_loss(logits, target, gamma=2, block_rows=None):
    """logits: (N, C) float (f32 or bf16); target: (N,) or (N, 1) int.
    Returns scalar f32: mean(-(1 - Pt)**gamma * log2(Pt))."""
    n, c_dim = logits.shape
    target = jnp.asarray(target, dtype=jnp.int32).reshape(n, 1)

    in_itemsize = jnp.dtype(logits.dtype).itemsize
    sublane = 16 if in_itemsize == 2 else 8               # bf16 sublane packing
    cp = _round_up(c_dim, 128)                            # lane-padded class dim

    # Row-tile size from the f32 compute footprint: ~1 MiB of f32 per logits
    # block; every (TM, C) intermediate is f32 regardless of input dtype.
    if block_rows is None:
        tile_f32_bytes = 1 << 20
        tm = tile_f32_bytes // (cp * 4)
        tm = max(sublane, min(1024, tm // sublane * sublane))
    else:
        tm = max(sublane, _round_up(int(block_rows), sublane))
    tm = min(tm, _round_up(n, sublane))

    n_cores = _num_tensorcores() if n >= 2 * tm else 1
    total_tiles = pl.cdiv(n, tm)
    tiles_per_core = pl.cdiv(total_tiles, n_cores)
    last_tile = total_tiles - 1

    # Explicit VMEM budget: double-buffered input blocks + live f32 intermediates
    # + lane-padded (TM,1) target/acc buffers + headroom; cap at 48 MiB (v7x-safe).
    vmem_bytes = (
        2 * tm * cp * in_itemsize          # logits double buffer
        + 6 * tm * cp * 4                  # live (TM, C) f32 intermediates
        + 2 * tm * 128 * 4                 # target double buffer ((tm,1) lane-padded)
        + 2 * tm * 128 * 4                 # acc + (tm,1) f32 temporaries
        + 2 * 8 * 128 * 4                  # output block
        + (1 << 20))                       # headroom
    vmem_bytes = int(min(max(vmem_bytes, 16 << 20), 48 << 20))

    kernel = functools.partial(_focal_loss_kernel, gamma=gamma, n_rows=n, tm=tm)

    def in_map(c, i):
        # Clamp so fully out-of-range logical tiles (odd total_tiles with a
        # 2-core split) just re-read the last valid tile; the in-kernel row
        # mask zeroes their contribution. No host-side padding of logits.
        return (jnp.minimum(c * tiles_per_core + i, last_tile), 0)

    cost = pl.CostEstimate(
        flops=8 * n * c_dim,
        transcendentals=n * (c_dim + 3),
        bytes_accessed=n * c_dim * in_itemsize + n * 4 + n_cores * 8 * 128 * 4,
    )

    # Per-core partial sums, written as lane-dense, tile-aligned (8, 128) blocks.
    partials = pl.pallas_call(
        kernel,
        out_shape=jax.ShapeDtypeStruct((n_cores * 8, 128), jnp.float32),
        grid_spec=pltpu.PrefetchScalarGridSpec(
            num_scalar_prefetch=0,
            grid=(n_cores, tiles_per_core),
            in_specs=[
                pl.BlockSpec((tm, c_dim), in_map),
                pl.BlockSpec((tm, 1), in_map),
            ],
            out_specs=pl.BlockSpec((8, 128), lambda c, i: (c, 0)),
            scratch_shapes=[pltpu.VMEM((tm, 1), jnp.float32)],
        ),
        compiler_params=pltpu.CompilerParams(
            dimension_semantics=("parallel", "arbitrary"),
            vmem_limit_bytes=vmem_bytes,
        ),
        cost_estimate=cost,
    )(logits, target)

    return jnp.sum(partials[0::8, 0]) / jnp.float32(n)


if __name__ == "__main__":
    key = jax.random.PRNGKey(0)
    k1, k2, k3, k4 = jax.random.split(key, 4)

    def reference(logits, target, gamma=2):
        probs = jax.nn.softmax(logits.astype(jnp.float32), axis=1)
        pt = probs[jnp.arange(logits.shape[0]), jnp.asarray(target).reshape(-1)]
        return jnp.mean(-((1.0 - pt) ** gamma) * jnp.log2(pt))

    # Case 1: small, tile-aligned batch (8 samples, 32 classes).
    N1, C = 8, 32
    logits1 = jax.random.normal(k1, (N1, C), dtype=jnp.float32)
    target1 = jax.random.randint(k2, (N1, 1), 0, C, dtype=jnp.int32)
    out1 = focal_loss(logits1, target1, gamma=2)
    jax.block_until_ready(out1)
    ref1 = reference(logits1, target1, gamma=2)
    assert jnp.allclose(out1, ref1, atol=1e-5, rtol=1e-4), (out1, ref1)

    # Case 2: N not a multiple of the row tile (exercises the clamped index_map
    # and the tail-row select-mask path with no host-side padding of logits).
    N2 = 40
    logits2 = jax.random.normal(k3, (N2, C), dtype=jnp.float32)
    target2 = jax.random.randint(k4, (N2, 1), 0, C, dtype=jnp.int32)
    out2 = focal_loss(logits2, target2, gamma=2, block_rows=16)
    jax.block_until_ready(out2)
    ref2 = reference(logits2, target2, gamma=2)
    assert jnp.allclose(out2, ref2, atol=1e-5, rtol=1e-4), (out2, ref2)

    print("KERNEL_OK")
</pallas_src>

<mosaic_0001>
module attributes {stable_mosaic.version = 11 : i64} {
  func.func @_focal_loss_kernel(%arg0: i32, %arg1: i32, %arg2: memref<8x32xf32, #tpu.memory_space<vmem>>, %arg3: memref<8x1xi32, #tpu.memory_space<vmem>>, %arg4: memref<8x128xf32, #tpu.memory_space<vmem>>, %arg5: memref<8x1xf32, #tpu.memory_space<vmem>>) attributes {dimension_semantics = [#tpu.dimension_semantics<parallel>, #tpu.dimension_semantics<arbitrary>], iteration_bounds = array<i64: 1, 1>, scalar_prefetch = 0 : i64, scratch_operands = 1 : i64, tpu.core_type = #tpu.core_type<tc>, window_params = [{transform_indices = @transform_0, window_bounds = array<i64: 8, 32>}, {transform_indices = @transform_1, window_bounds = array<i64: 8, 1>}, {transform_indices = @transform_2, window_bounds = array<i64: 8, 128>}]} {
    %c0_i32 = arith.constant 0 : i32
    %0 = arith.cmpi eq, %arg1, %c0_i32 : i32
    %1 = arith.extui %0 : i1 to i32
    %c0_i32_0 = arith.constant 0 : i32
    %2 = arith.cmpi ne, %1, %c0_i32_0 : i32
    scf.if %2 {
      %cst_19 = arith.constant 0.000000e+00 : f32
      %49 = vector.broadcast %cst_19 : f32 to vector<8x1xf32>
      %c0_20 = arith.constant 0 : index
      %c0_21 = arith.constant 0 : index
      %50 = vector.load %arg5[%c0_20, %c0_21] : memref<8x1xf32, #tpu.memory_space<vmem>>, vector<8x1xf32>
      tpu.vector_store %arg5[%c0_20, %c0_21], %49 {strides = array<i32>} : memref<8x1xf32, #tpu.memory_space<vmem>>, vector<8x1xf32>,
    } else {
    }
    %c0 = arith.constant 0 : index
    %c0_1 = arith.constant 0 : index
    %3 = vector.load %arg2[%c0, %c0_1] : memref<8x32xf32, #tpu.memory_space<vmem>>, vector<8x32xf32>
    %c0_2 = arith.constant 0 : index
    %c0_3 = arith.constant 0 : index
    %4 = vector.load %arg3[%c0_2, %c0_3] : memref<8x1xi32, #tpu.memory_space<vmem>>, vector<8x1xi32>
    %cst = arith.constant dense<0xFF800000> : vector<8xf32>
    %5 = vector.multi_reduction <maximumf>, %3, %cst [1] : vector<8x32xf32> to vector<8xf32>
    %6 = vector.shape_cast %5 : vector<8xf32> to vector<8x1xf32>
    %7 = vector.broadcast %6 : vector<8x1xf32> to vector<8x32xf32>
    %8 = arith.subf %3, %7 : vector<8x32xf32>
    %9 = math.exp %8 : vector<8x32xf32>
    %cst_4 = arith.constant dense<0.000000e+00> : vector<8xf32>
    %10 = vector.multi_reduction <add>, %9, %cst_4 [1] : vector<8x32xf32> to vector<8xf32>
    %11 = vector.shape_cast %10 : vector<8xf32> to vector<8x1xf32>
    %12 = tpu.iota {dimensions = array<i32: 1>} : vector<1x32xi32>
    %13 = vector.broadcast %12 : vector<1x32xi32> to vector<8x32xi32>
    %14 = vector.broadcast %4 : vector<8x1xi32> to vector<8x32xi32>
    %15 = arith.cmpi eq, %13, %14 : vector<8x32xi32>
    %cst_5 = arith.constant 0.000000e+00 : f32
    %16 = vector.broadcast %cst_5 : f32 to vector<8x32xf32>
    %17 = arith.select %15, %8, %16 : vector<8x32xi1>, vector<8x32xf32>
    %cst_6 = arith.constant dense<0.000000e+00> : vector<8xf32>
    %18 = vector.multi_reduction <add>, %17, %cst_6 [1] : vector<8x32xf32> to vector<8xf32>
    %19 = vector.shape_cast %18 : vector<8xf32> to vector<8x1xf32>
    %20 = math.log %11 : vector<8x1xf32>
    %21 = arith.subf %19, %20 : vector<8x1xf32>
    %22 = math.exp %21 : vector<8x1xf32>
    %cst_7 = arith.constant 1.000000e+00 : f32
    %23 = vector.broadcast %cst_7 : f32 to vector<8x1xf32>
    %24 = arith.subf %23, %22 : vector<8x1xf32>
    %cst_8 = arith.constant 1.000000e+00 : f32
    %25 = vector.broadcast %cst_8 : f32 to vector<8x1xf32>
    %26 = arith.mulf %25, %24 : vector<8x1xf32>
    %27 = arith.mulf %26, %24 : vector<8x1xf32>
    %28 = arith.mulf %27, %21 : vector<8x1xf32>
    %cst_9 = arith.constant 0.000000e+00 : f32
    %29 = vector.broadcast %cst_9 : f32 to vector<8x1xf32>
    %30 = arith.subf %29, %28 : vector<8x1xf32>
    %cst_10 = arith.constant 1.44269502 : f32
    %31 = vector.broadcast %cst_10 : f32 to vector<8x1xf32>
    %32 = arith.mulf %30, %31 : vector<8x1xf32>
    %33 = tpu.iota {dimensions = array<i32: 0>} : vector<8x1xi32>
    %c1_i32 = arith.constant 1 : i32
    %34 = arith.muli %arg0, %c1_i32 : i32
    %35 = arith.addi %34, %arg1 : i32
    %c8_i32 = arith.constant 8 : i32
    %36 = arith.muli %35, %c8_i32 : i32
    %37 = vector.broadcast %36 : i32 to vector<8x1xi32>
    %38 = arith.addi %37, %33 : vector<8x1xi32>
    %c8_i32_11 = arith.constant 8 : i32
    %39 = vector.broadcast %c8_i32_11 : i32 to vector<8x1xi32>
    %40 = arith.cmpi slt, %38, %39 : vector<8x1xi32>
    %cst_12 = arith.constant 0.000000e+00 : f32
    %41 = vector.broadcast %cst_12 : f32 to vector<8x1xf32>
    %42 = arith.select %40, %32, %41 : vector<8x1xi1>, vector<8x1xf32>
    %c0_13 = arith.constant 0 : index
    %c0_14 = arith.constant 0 : index
    %43 = vector.load %arg5[%c0_13, %c0_14] : memref<8x1xf32, #tpu.memory_space<vmem>>, vector<8x1xf32>
    %44 = arith.addf %43, %42 : vector<8x1xf32>
    %c0_15 = arith.constant 0 : index
    %c0_16 = arith.constant 0 : index
    %45 = vector.load %arg5[%c0_15, %c0_16] : memref<8x1xf32, #tpu.memory_space<vmem>>, vector<8x1xf32>
    tpu.vector_store %arg5[%c0_15, %c0_16], %44 {strides = array<i32>} : memref<8x1xf32, #tpu.memory_space<vmem>>, vector<8x1xf32>,
    %c0_i32_17 = arith.constant 0 : i32
    %46 = arith.cmpi eq, %arg1, %c0_i32_17 : i32
    %47 = arith.extui %46 : i1 to i32
    %c0_i32_18 = arith.constant 0 : i32
    %48 = arith.cmpi ne, %47, %c0_i32_18 : i32
    scf.if %48 {
      %c0_19 = arith.constant 0 : index
      %c0_20 = arith.constant 0 : index
      %49 = vector.load %arg5[%c0_19, %c0_20] : memref<8x1xf32, #tpu.memory_space<vmem>>, vector<8x1xf32>
      %50 = vector.shape_cast %49 : vector<8x1xf32> to vector<1x8x1xf32>
      %cst_21 = arith.constant dense<0.000000e+00> : vector<1xf32>
      %51 = vector.multi_reduction <add>, %50, %cst_21 [1, 2] : vector<1x8x1xf32> to vector<1xf32>
      %52 = vector.shape_cast %51 : vector<1xf32> to vector<1x1x1xf32>
      %53 = vector.extract %52[0, 0, 0] : f32 from vector<1x1x1xf32>
      %54 = vector.broadcast %53 : f32 to vector<8x128xf32>
      %c0_22 = arith.constant 0 : index
      %c0_23 = arith.constant 0 : index
      %55 = vector.load %arg4[%c0_22, %c0_23] : memref<8x128xf32, #tpu.memory_space<vmem>>, vector<8x128xf32>
      tpu.vector_store %arg4[%c0_22, %c0_23], %54 {strides = array<i32>} : memref<8x128xf32, #tpu.memory_space<vmem>>, vector<8x128xf32>,
    } else {
    }
    return
  }
  func.func @transform_0(%arg0: i32, %arg1: i32) -> (i32, i32) {
    %c1_i32 = arith.constant 1 : i32
    %0 = arith.muli %arg0, %c1_i32 : i32
    %1 = arith.addi %0, %arg1 : i32
    %c0_i32 = arith.constant 0 : i32
    %2 = arith.minsi %1, %c0_i32 : i32
    %c0_i32_0 = arith.constant 0 : i32
    %c0_i32_1 = arith.constant 0 : i32
    return %2, %c0_i32_0 : i32, i32
  }
  func.func @transform_1(%arg0: i32, %arg1: i32) -> (i32, i32) {
    %c1_i32 = arith.constant 1 : i32
    %0 = arith.muli %arg0, %c1_i32 : i32
    %1 = arith.addi %0, %arg1 : i32
    %c0_i32 = arith.constant 0 : i32
    %2 = arith.minsi %1, %c0_i32 : i32
    %c0_i32_0 = arith.constant 0 : i32
    %c0_i32_1 = arith.constant 0 : i32
    return %2, %c0_i32_0 : i32, i32
  }
  func.func @transform_2(%arg0: i32, %arg1: i32) -> (i32, i32) {
    %c0_i32 = arith.constant 0 : i32
    %c0_i32_0 = arith.constant 0 : i32
    return %arg0, %c0_i32 : i32, i32
  }
}

</mosaic_0001>

<llo_original>
// kernel: tpu_custom_call.1
$region0: #{tpu_custom_call.1}
  #allocation0 [shape = 'u32[]', space=smem, size = 0x4, offset = 0x4, fixed_abs, tag = 'smem constant byte address 0x4 - core index']
  #allocation1 [shape = 'u32[144,128]{1,0:T(1,128)}', space=vmem, size = 0x12000, scoped, tag = 'internal scratch']
  #allocation2 [shape = 'f32[8,1]{1,0:T(8,128)}', space=vmem, size = 0x1000, scoped, tag = 'scratch operand']
  %s0 = inlined_call_operand.vmem [shape: f32[8,32], index: 0, kind: input, shape index: {}]
  %s1 = inlined_call_operand.vmem [shape: s32[8,1], index: 1, kind: input, shape index: {}]
  %s2 = inlined_call_operand.hbm [shape: f32[8,128], index: 2, kind: output, shape index: {}]
  %s3 = sld [smem:[#allocation0]]
  $region26: #{tpu_custom_call.1} parent=0
    _
  %s5 = ssub.s32 1, %s3
  %s6 = scalar_select 0, %s5, %s3
  $region1: #{tpu_custom_call.1} parent=0
    #allocation3 [shape = 'u8[4096]{0}', space=vmem, size = 0x1000, scoped, tag = 'output window, operand 0, single buffered']
    #allocation4 [shape = 's32[1]{0}', space=sflag, size = 0x4, scoped, tag = 'scoped memory for tpu_custom_call.1']
    %7 = vsyncpa [#allocation4], 0
    // Predicated region
    $region2: #{tpu_custom_call.1} parent=1 // pred_check
      _
    $region3: #{tpu_custom_call.1} parent=1 // pred_check_branch
      %9 = sbr.rel (0) target = $region5
    $region4: #{tpu_custom_call.1} parent=1 // pred_region
      %s10 = sadd.s32 0, 0
      %p11 = scmp.lt.s32.totalorder %s10, 0
      %s12 = scalar_select %p11, %s10, 0
      %p13 = scmp.lt.s32.totalorder %s12, 0
      %s14 = scalar_select %p13, %s12, 0
      %s15 = smul.addr %s14, 8
      %s16 = scalar_lea.vmem %s0, %s15
      %s17 = sadd.s32 0, 0
      %p18 = scmp.lt.s32.totalorder %s17, 0
      %s19 = scalar_select %p18, %s17, 0
    $region5: #{tpu_custom_call.1} parent=1 // pred_fallthru
      _
    // Predicated region
    $region6: #{tpu_custom_call.1} parent=1 // pred_check
      _
    $region7: #{tpu_custom_call.1} parent=1 // pred_check_branch
      %21 = sbr.rel (0) target = $region9
    $region8: #{tpu_custom_call.1} parent=1 // pred_region
      %s22 = sadd.s32 0, 0
      %p23 = scmp.lt.s32.totalorder %s22, 0
      %s24 = scalar_select %p23, %s22, 0
      %p25 = scmp.lt.s32.totalorder %s24, 0
      %s26 = scalar_select %p25, %s24, 0
      %s27 = smul.addr %s26, 8
      %s28 = scalar_lea.vmem %s1, %s27
      %s29 = sadd.s32 0, 0
      %p30 = scmp.lt.s32.totalorder %s29, 0
      %s31 = scalar_select %p30, %s29, 0
    $region9: #{tpu_custom_call.1} parent=1 // pred_fallthru
      _
    %s32 = sadd.s32 0, 0
    %p33 = scmp.lt.s32.totalorder %s32, 0
    %s34 = scalar_select %p33, %s32, 0
    %p35 = scmp.lt.s32.totalorder %s34, 0
    %s36 = scalar_select %p35, %s34, 0
    %s37 = smul.addr %s36, 8
    %s38 = scalar_lea.vmem %s0, %s37
    %s39 = sadd.s32 0, 0
    %p40 = scmp.lt.s32.totalorder %s39, 0
    %s41 = scalar_select %p40, %s39, 0
    %p42 = scmp.lt.s32.totalorder %s41, 0
    %s43 = scalar_select %p42, %s41, 0
    %s44 = smul.addr %s43, 8
    %s45 = scalar_lea.vmem %s1, %s44
    %s46 = sadd.s32 0, 0
    %p47 = scmp.lt.s32.totalorder %s46, 0
    %s48 = scalar_select %p47, %s46, 0
    %p49 = scmp.lt.s32.totalorder %s48, 0
    %s50 = scalar_select %p49, %s48, 0
    %s51 = smul.addr %s50, 8
    %s52 = scalar_lea.vmem %s0, %s51
    %s53 = sadd.s32 0, 0
    %p54 = scmp.lt.s32.totalorder %s53, 0
    %s55 = scalar_select %p54, %s53, 0
    %s56 = sadd.s32 0, 0
    %p57 = scmp.lt.s32.totalorder %s56, 0
    %s58 = scalar_select %p57, %s56, 0
    %p59 = scmp.lt.s32.totalorder %s58, 0
    %s60 = scalar_select %p59, %s58, 0
    %s61 = smul.addr %s60, 8
    %s62 = scalar_lea.vmem %s1, %s61
    %s63 = sadd.s32 0, 0
    %p64 = scmp.lt.s32.totalorder %s63, 0
    %s65 = scalar_select %p64, %s63, 0
    %p66 = scmp.eq.s32.totalorder 0, 0
    // Predicated region
    $region10: #{tpu_custom_call.1} parent=1 // pred_check
      %p67 = pneg %p66
    $region11: #{tpu_custom_call.1} parent=1 // pred_check_branch
      %69 = sbr.rel (%p67) target = $region13
    $region12: #{tpu_custom_call.1} parent=1 // pred_region
      %vm70 = vcmask 7168
      %71 = vst.msk [vmem:[#allocation2] sm:$0xff] %vm70, 0.0
    $region13: #{tpu_custom_call.1} parent=1 // pred_fallthru
      _
    %v72 = vld [vmem:[%s52] sm:$0xff]
    %v73 = vld [vmem:[%s62] sm:$0xff]
    %vm74 = vcmask 261120
    %v75 = vsel %vm74, %v72, -inf
    %76 = vmax.xlane.f32.xlu0 %v75
    %v77 = vpop.xlane.xlu0 %76
    %v78 = vsub.f32 %v72, %v77
    %v79 = vmul.f32 %v78, 1.442695
    %v80 = vpow.pop %v79
    %v81 = vsel %vm74, %v80, 0.0
    %82 = vadd.xlane.f32.xlu0 %v81
    %v83 = vpop.xlane.xlu0 %82
    %v84 = vlaneseq
    %v85 = vand.u32 %v84, 127
    %86 = vset.pattern.permute.xlu0 0
    %87 = vperm.xlu0 %86, %v73
    %v88 = vpop.permute.xlu0 %87
    %vm89 = vcmp.eq.s32.totalorder %v85, %v88
    %v90 = vsel %vm89, %v78, 0.0
    %v91 = vsel %vm74, %v90, 0.0
    %92 = vadd.xlane.f32.xlu0 %v91
    %v93 = vpop.xlane.xlu0 %92
    %v94 = vlog2.pop %v83
    %v95 = vmul.f32 %v94, 0.6931472
    %v96 = vsub.f32 %v93, %v95
    %v97 = vmul.f32 %v96, 1.442695
    %v98 = vpow.pop %v97
    %v99 = vsub.f32 1.0, %v98
    %v100 = vmul.f32 %v99, %v99
    %v101 = vmul.f32 %v100, %v96
    %v102 = vsub.f32 0.0, %v101
    %v103 = vmul.f32 %v102, 1.442695
    %v104 = vlaneseq
    %v105 = vshrl.u32 %v104, 7
    %s106 = sadd.s32 0, 0
    %s107 = smul.u32 %s106, 8
    %v108 = vstv %s107
    %v109 = vadd.s32 %v108, %v105
    %vm110 = vcmp.lt.s32.totalorder %v109, 8
    %v111 = vsel %vm110, %v103, 0.0
    %v112 = vld [vmem:[#allocation2] sm:$0xff]
    %v113 = vadd.f32 %v112, %v111
    %vm114 = vcmask 7168
    %115 = vst.msk [vmem:[#allocation2] sm:$0xff] %vm114, %v113
    // Predicated region
    $region14: #{tpu_custom_call.1} parent=1 // pred_check
      %p116 = pneg %p66
    $region15: #{tpu_custom_call.1} parent=1 // pred_check_branch
      %118 = sbr.rel (%p116) target = $region17
    $region16: #{tpu_custom_call.1} parent=1 // pred_region
      %v119 = vld [vmem:[#allocation2] sm:$0xff]
      %v120 = vsel %vm114, %v119, 0.0
      %121 = vadd.xlane.f32.xlu0 %v120
      %v122 = vpop.xlane.xlu0 %121
      %v123 = vrot.slane %v122, 4
      %v124 = vadd.f32 %v122, %v123
      %v125 = vrot.slane %v124, 2
      %v126 = vadd.f32 %v124, %v125
      %v127 = vrot.slane %v126, 1
      %v128 = vadd.f32 %v126, %v127
      %s129 = vtos %v128
      %v130 = vstv %s129
      %131 = vst [vmem:[#allocation3] sm:$0xff] %v130
    $region17: #{tpu_custom_call.1} parent=1 // pred_fallthru
      _
    // Predicated region
    $region18: #{tpu_custom_call.1} parent=1 // pred_check
      _
    $region19: #{tpu_custom_call.1} parent=1 // pred_check_branch
      %133 = sbr.rel (0) target = $region21
    $region20: #{tpu_custom_call.1} parent=1 // pred_region
      %s135 = ssub.s32 128, 128
      %136 = vsyncadd [#allocation4], %s135
      %s138 = sshll.u32 [#allocation3], 4
      %s139 = int_to_ptr.vmem [resolvable:$true] %s138
      %141 = dma.vmem_to_hbm [thread:$0]  %s139, 128, %s2, [#allocation4]
    $region21: #{tpu_custom_call.1} parent=1 // pred_fallthru
      _
    // Predicated region
    $region22: #{tpu_custom_call.1} parent=1 // pred_check
      _
    $region23: #{tpu_custom_call.1} parent=1 // pred_check_branch
      %143 = sbr.rel (0) target = $region25
    $region24: #{tpu_custom_call.1} parent=1 // pred_region
      %144 = dma.done [#allocation4], 128
    $region25: #{tpu_custom_call.1} parent=1 // pred_fallthru
      _
    %145 = vsyncpa [#allocation4], 1

</llo_original>
